<compile_context>
chip_gen: v6e
topology: v6e:2x2x1
jax: 0.10.0
libtpu: 0.0.40
codegen_flags: <defaults>
</compile_context>

<pallas_src>
import jax
import jax.numpy as jnp
from jax.experimental import pallas as pl
from jax.experimental.pallas import tpu as pltpu

LANE = 128
SUBLANE = 8
# Target bytes per streamed block: ~1 MiB amortizes the ~0.35 us per-grid-step overhead
# (>=85% of HBM roofline at 512-row f32 tiles) while keeping double-buffered VMEM tiny.
TARGET_BLOCK_BYTES = 1 << 20


# ----------------------------- Pallas kernel -----------------------------
def _build_sumsq_kernel(num_grads):
    """Kernel: grid iterates over all blocks of all gradients in segment order.

    refs = (seg_ref [SMEM, prefetched], grad_ref_0 ... grad_ref_{P-1} [VMEM blocks],
            o_ref [VMEM, (1,1,LANE) block indexed by segment id]).
    The resident output block doubles as the accumulator for its segment.
    """

    def kernel(*refs):
        seg_ref = refs[0]
        grad_refs = refs[1:1 + num_grads]
        o_ref = refs[1 + num_grads]

        i = pl.program_id(0)
        seg = seg_ref[i]
        prev_seg = seg_ref[jnp.maximum(i - 1, 0)]
        is_first = jnp.logical_or(i == 0, seg != prev_seg)

        # New segment: reset the resident output block (it is the accumulator).
        @pl.when(is_first)
        def _():
            o_ref[...] = jnp.zeros_like(o_ref)

        # Only the active parameter's branch runs.  Every other input kept a constant
        # block index this step, so no DMA was issued for it (each gradient block is
        # fetched from HBM exactly once over the whole grid).
        for p, g_ref in enumerate(grad_refs):

            @pl.when(seg == p)
            def _(g_ref=g_ref):
                x = g_ref[...].astype(jnp.float32)   # only upcast happens here (VPU slack)
                # Full reduce to a scalar: cross-lane/sublane reduce uses the idle XLU
                # slot; broadcast into the lane-dense (1,1,LANE) output row.
                o_ref[...] = o_ref[...] + jnp.sum(x * x)

    return kernel


# --------------------------- schedule / wrapper ---------------------------
def _as_2d(g):
    """Layout-preserving 2-D view (no copy): collapse trailing dims; 0-D/1-D -> one row."""
    if g.ndim == 0:
        return g.reshape(1, 1)
    if g.ndim == 1:
        return g.reshape(1, g.shape[0])
    return g.reshape(g.shape[0], -1)


def _row_block(rows, cols, itemsize):
    """Rows per streamed block for one parameter.

    Biggest multiple-of-SUBLANE divisor of `rows` whose block stays under the byte
    target (Mosaic's (8,128) rule: the 2nd-minor block dim must be a multiple of 8 or
    equal the full dim).  Falls back to the full dim (single block)."""
    target_rows = max(1, TARGET_BLOCK_BYTES // max(1, cols * itemsize))
    if rows <= target_rows:
        return rows
    cand = (target_rows // SUBLANE) * SUBLANE
    while cand >= SUBLANE:
        if rows % cand == 0:
            return cand
        cand -= SUBLANE
    return rows


def fused_trace_sumsq(grads):
    """traces[name] = (grads[name] ** 2).sum(); all parameters in ONE pallas_call.

    No padding, no concatenation, no host upcast: each gradient is read exactly once
    from HBM in lane-dense natural layout."""
    names = sorted(grads.keys())
    # Zero-sized gradients would leave an unwritten output block -> filter them out.
    active = [n for n in names if int(grads[n].size) > 0]
    traces = {n: jnp.float32(0.0) for n in names}
    if not active:
        return traces

    views, specs, seg_ids = [], [], []
    total_bytes = 0
    start = 0
    for p, name in enumerate(active):
        g2 = _as_2d(grads[name])
        rows, cols = int(g2.shape[0]), int(g2.shape[1])
        rblk = _row_block(rows, cols, g2.dtype.itemsize)
        if rows % rblk != 0:          # safety: never let a partial block read stale VMEM
            rblk = rows
        nblk = rows // rblk
        total_bytes += int(g2.size) * g2.dtype.itemsize

        def index_map(i, seg_ref, _start=start, _nblk=nblk):
            # Clamp outside [start, start + nblk): a constant block index makes Pallas
            # skip the DMA, so this gradient is streamed exactly once over the grid.
            j = jnp.minimum(jnp.maximum(i - _start, 0), _nblk - 1)
            return (j, 0)

        kwargs = {}
        if nblk >= 3:
            # Deeper buffering only pays off when a parameter actually streams many
            # blocks (helps hide per-step overhead on fast-HBM chips like v7x).
            kwargs = dict(pipeline_mode=pl.Buffered(3))
        specs.append(pl.BlockSpec((rblk, cols), index_map, **kwargs))
        views.append(g2)
        seg_ids += [p] * nblk
        start += nblk

    # Flush logic relies on each output block being visited in one contiguous run of
    # monotonically increasing segment ids — assert the schedule really looks like that.
    assert all(seg_ids[k] <= seg_ids[k + 1] for k in range(len(seg_ids) - 1))
    assert sorted(set(seg_ids)) == list(range(len(active)))

    nblk_total = len(seg_ids)
    num_active = len(active)
    seg_arr = jnp.asarray(seg_ids, dtype=jnp.int32)

    out = pl.pallas_call(
        _build_sumsq_kernel(num_active),
        out_shape=jax.ShapeDtypeStruct((num_active, 1, LANE), jnp.float32),
        grid_spec=pltpu.PrefetchScalarGridSpec(
            num_scalar_prefetch=1,
            grid=(nblk_total,),
            in_specs=specs,
            out_specs=pl.BlockSpec((1, 1, LANE), lambda i, seg: (seg[i], 0, 0)),
        ),
        compiler_params=pltpu.CompilerParams(
            dimension_semantics=("arbitrary",),
        ),
        cost_estimate=pl.CostEstimate(
            flops=2 * sum(int(grads[n].size) for n in active),
            transcendentals=0,
            bytes_accessed=total_bytes + num_active * LANE * 4,
        ),
    )(seg_arr, *views)

    partials = out[:, 0, 0]  # every lane holds the same scalar; take lane 0
    for p, name in enumerate(active):
        traces[name] = partials[p]
    return traces


# ------------------------------ glue (model) ------------------------------
def mlp_forward(params, x):
    # Synthetic "self.model": Linear(D,H) -> tanh -> Linear(H,C). Weights stored
    # torch-style as [out_features, in_features].
    h = jnp.tanh(x @ params["fc1.weight"].T + params["fc1.bias"])
    return h @ params["fc2.weight"].T + params["fc2.bias"]


def cross_entropy(logits, labels):
    # torch.nn.CrossEntropyLoss(reduction="mean")
    logz = jax.nn.logsumexp(logits, axis=-1)
    ll = jnp.take_along_axis(logits, labels[:, None], axis=-1)[:, 0]
    return jnp.mean(logz - ll)


def fisher_penalty(params, x, key, penalized_names):
    # y_pred (in torch this is passed in; grads flow through the model)
    logits = mlp_forward(params, x)

    # y_sampled = Categorical(logits=y_pred).sample()
    y_sampled = jax.random.categorical(key, logits)

    # grads = autograd.grad(loss, params)
    loss_fn = lambda p: cross_entropy(mlp_forward(p, x), y_sampled)
    grads = jax.grad(loss_fn)(params)

    # One fused Pallas reduction for all parameter traces.
    traces = fused_trace_sumsq(grads)

    overall_trace = jnp.float32(0.0)
    for name in sorted(traces.keys()):
        if name in penalized_names:
            overall_trace = overall_trace + traces[name]
    return overall_trace, traces, grads


# ---------------------------------- main ----------------------------------
if __name__ == "__main__":
    B, D, H, C = 8, 32, 64, 10  # batch, in-features, hidden, num_classes

    key = jax.random.PRNGKey(0)
    k_x, k_w1, k_w2, k_sample = jax.random.split(key, 4)

    x = jax.random.normal(k_x, (B, D), dtype=jnp.float32)
    params = {
        "fc1.weight": 0.1 * jax.random.normal(k_w1, (H, D), dtype=jnp.float32),
        "fc1.bias": jnp.zeros((H,), dtype=jnp.float32),
        "fc2.weight": 0.1 * jax.random.normal(k_w2, (C, H), dtype=jnp.float32),
        "fc2.bias": jnp.zeros((C,), dtype=jnp.float32),
    }
    # get_every_but_forbidden_parameter_names(...): weights penalized, biases excluded
    # (stand-in for FORBIDDEN_LAYER_TYPES filtering).
    penalized_names = frozenset({"fc1.weight", "fc2.weight"})

    overall_trace, traces, grads = fisher_penalty(params, x, k_sample, penalized_names)
    overall_trace = jax.block_until_ready(overall_trace)
    traces = jax.block_until_ready(traces)

    # reference check: trace_p == (grad**2).sum(), overall == sum over penalized
    ok = True
    ref_overall = 0.0
    for name, g in grads.items():
        ref = jnp.sum(g.astype(jnp.float32) ** 2)
        ok &= bool(jnp.allclose(traces[name], ref, rtol=1e-5, atol=1e-6))
        if name in penalized_names:
            ref_overall = ref_overall + ref
    ok &= bool(jnp.allclose(overall_trace, ref_overall, rtol=1e-5, atol=1e-6))

    if ok:
        print("KERNEL_OK")
    else:
        print("MISMATCH")
</pallas_src>

<mosaic_0001>
module attributes {stable_mosaic.version = 11 : i64} {
  func.func @kernel(%arg0: i32, %arg1: memref<4xi32, #tpu.memory_space<smem>>, %arg2: memref<1x64xf32, #tpu.memory_space<vmem>>, %arg3: memref<64x32xf32, #tpu.memory_space<vmem>>, %arg4: memref<1x10xf32, #tpu.memory_space<vmem>>, %arg5: memref<10x64xf32, #tpu.memory_space<vmem>>, %arg6: memref<1x1x128xf32, #tpu.memory_space<vmem>>) attributes {dimension_semantics = [#tpu.dimension_semantics<arbitrary>], iteration_bounds = array<i64: 4>, scalar_prefetch = 1 : i64, scratch_operands = 0 : i64, tpu.core_type = #tpu.core_type<tc>, window_params = [{transform_indices = @transform_0, window_bounds = array<i64: 1, 64>}, {transform_indices = @transform_1, window_bounds = array<i64: 64, 32>}, {transform_indices = @transform_2, window_bounds = array<i64: 1, 10>}, {transform_indices = @transform_3, window_bounds = array<i64: 10, 64>}, {transform_indices = @transform_4, window_bounds = array<i64: 1, 1, 128>}]} {
    %0 = arith.index_cast %arg0 : i32 to index
    %1 = memref.load %arg1[%0] : memref<4xi32, #tpu.memory_space<smem>>
    %c1_i32 = arith.constant 1 : i32
    %2 = arith.subi %arg0, %c1_i32 : i32
    %c0_i32 = arith.constant 0 : i32
    %3 = arith.maxsi %2, %c0_i32 : i32
    %4 = arith.index_cast %3 : i32 to index
    %5 = memref.load %arg1[%4] : memref<4xi32, #tpu.memory_space<smem>>
    %c0_i32_0 = arith.constant 0 : i32
    %6 = arith.cmpi eq, %arg0, %c0_i32_0 : i32
    %7 = arith.cmpi ne, %1, %5 : i32
    %8 = arith.ori %6, %7 : i1
    %9 = arith.extui %8 : i1 to i32
    %c0_i32_1 = arith.constant 0 : i32
    %10 = arith.cmpi ne, %9, %c0_i32_1 : i32
    scf.if %10 {
      %cst = arith.constant 0.000000e+00 : f32
      %23 = vector.broadcast %cst : f32 to vector<1x1x128xf32>
      %c0 = arith.constant 0 : index
      %c0_8 = arith.constant 0 : index
      %c0_9 = arith.constant 0 : index
      %24 = vector.load %arg6[%c0, %c0_8, %c0_9] : memref<1x1x128xf32, #tpu.memory_space<vmem>>, vector<1x1x128xf32>
      tpu.vector_store %arg6[%c0, %c0_8, %c0_9], %23 {strides = array<i32>} : memref<1x1x128xf32, #tpu.memory_space<vmem>>, vector<1x1x128xf32>,
    } else {
    }
    %c0_i32_2 = arith.constant 0 : i32
    %11 = arith.cmpi eq, %1, %c0_i32_2 : i32
    %12 = arith.extui %11 : i1 to i32
    %c0_i32_3 = arith.constant 0 : i32
    %13 = arith.cmpi ne, %12, %c0_i32_3 : i32
    scf.if %13 {
      %c0 = arith.constant 0 : index
      %c0_8 = arith.constant 0 : index
      %23 = vector.load %arg2[%c0, %c0_8] : memref<1x64xf32, #tpu.memory_space<vmem>>, vector<1x64xf32>
      %c0_9 = arith.constant 0 : index
      %c0_10 = arith.constant 0 : index
      %c0_11 = arith.constant 0 : index
      %24 = vector.load %arg6[%c0_9, %c0_10, %c0_11] : memref<1x1x128xf32, #tpu.memory_space<vmem>>, vector<1x1x128xf32>
      %25 = arith.mulf %23, %23 : vector<1x64xf32>
      %26 = vector.shape_cast %25 : vector<1x64xf32> to vector<1x1x64xf32>
      %cst = arith.constant dense<0.000000e+00> : vector<1xf32>
      %27 = vector.multi_reduction <add>, %26, %cst [1, 2] : vector<1x1x64xf32> to vector<1xf32>
      %28 = vector.shape_cast %27 : vector<1xf32> to vector<1x1x1xf32>
      %29 = vector.extract %28[0, 0, 0] : f32 from vector<1x1x1xf32>
      %30 = vector.broadcast %29 : f32 to vector<1x1x128xf32>
      %31 = arith.addf %24, %30 : vector<1x1x128xf32>
      %c0_12 = arith.constant 0 : index
      %c0_13 = arith.constant 0 : index
      %c0_14 = arith.constant 0 : index
      %32 = vector.load %arg6[%c0_12, %c0_13, %c0_14] : memref<1x1x128xf32, #tpu.memory_space<vmem>>, vector<1x1x128xf32>
      tpu.vector_store %arg6[%c0_12, %c0_13, %c0_14], %31 {strides = array<i32>} : memref<1x1x128xf32, #tpu.memory_space<vmem>>, vector<1x1x128xf32>,
    } else {
    }
    %c1_i32_4 = arith.constant 1 : i32
    %14 = arith.cmpi eq, %1, %c1_i32_4 : i32
    %15 = arith.extui %14 : i1 to i32
    %c0_i32_5 = arith.constant 0 : i32
    %16 = arith.cmpi ne, %15, %c0_i32_5 : i32
    scf.if %16 {
      %c0 = arith.constant 0 : index
      %c0_8 = arith.constant 0 : index
      %23 = vector.load %arg3[%c0, %c0_8] : memref<64x32xf32, #tpu.memory_space<vmem>>, vector<64x32xf32>
      %c0_9 = arith.constant 0 : index
      %c0_10 = arith.constant 0 : index
      %c0_11 = arith.constant 0 : index
      %24 = vector.load %arg6[%c0_9, %c0_10, %c0_11] : memref<1x1x128xf32, #tpu.memory_space<vmem>>, vector<1x1x128xf32>
      %25 = arith.mulf %23, %23 : vector<64x32xf32>
      %26 = vector.shape_cast %25 : vector<64x32xf32> to vector<1x64x32xf32>
      %cst = arith.constant dense<0.000000e+00> : vector<1xf32>
      %27 = vector.multi_reduction <add>, %26, %cst [1, 2] : vector<1x64x32xf32> to vector<1xf32>
      %28 = vector.shape_cast %27 : vector<1xf32> to vector<1x1x1xf32>
      %29 = vector.extract %28[0, 0, 0] : f32 from vector<1x1x1xf32>
      %30 = vector.broadcast %29 : f32 to vector<1x1x128xf32>
      %31 = arith.addf %24, %30 : vector<1x1x128xf32>
      %c0_12 = arith.constant 0 : index
      %c0_13 = arith.constant 0 : index
      %c0_14 = arith.constant 0 : index
      %32 = vector.load %arg6[%c0_12, %c0_13, %c0_14] : memref<1x1x128xf32, #tpu.memory_space<vmem>>, vector<1x1x128xf32>
      tpu.vector_store %arg6[%c0_12, %c0_13, %c0_14], %31 {strides = array<i32>} : memref<1x1x128xf32, #tpu.memory_space<vmem>>, vector<1x1x128xf32>,
    } else {
    }
    %c2_i32 = arith.constant 2 : i32
    %17 = arith.cmpi eq, %1, %c2_i32 : i32
    %18 = arith.extui %17 : i1 to i32
    %c0_i32_6 = arith.constant 0 : i32
    %19 = arith.cmpi ne, %18, %c0_i32_6 : i32
    scf.if %19 {
      %c0 = arith.constant 0 : index
      %c0_8 = arith.constant 0 : index
      %23 = vector.load %arg4[%c0, %c0_8] : memref<1x10xf32, #tpu.memory_space<vmem>>, vector<1x10xf32>
      %c0_9 = arith.constant 0 : index
      %c0_10 = arith.constant 0 : index
      %c0_11 = arith.constant 0 : index
      %24 = vector.load %arg6[%c0_9, %c0_10, %c0_11] : memref<1x1x128xf32, #tpu.memory_space<vmem>>, vector<1x1x128xf32>
      %25 = arith.mulf %23, %23 : vector<1x10xf32>
      %26 = vector.shape_cast %25 : vector<1x10xf32> to vector<1x1x10xf32>
      %cst = arith.constant dense<0.000000e+00> : vector<1xf32>
      %27 = vector.multi_reduction <add>, %26, %cst [1, 2] : vector<1x1x10xf32> to vector<1xf32>
      %28 = vector.shape_cast %27 : vector<1xf32> to vector<1x1x1xf32>
      %29 = vector.extract %28[0, 0, 0] : f32 from vector<1x1x1xf32>
      %30 = vector.broadcast %29 : f32 to vector<1x1x128xf32>
      %31 = arith.addf %24, %30 : vector<1x1x128xf32>
      %c0_12 = arith.constant 0 : index
      %c0_13 = arith.constant 0 : index
      %c0_14 = arith.constant 0 : index
      %32 = vector.load %arg6[%c0_12, %c0_13, %c0_14] : memref<1x1x128xf32, #tpu.memory_space<vmem>>, vector<1x1x128xf32>
      tpu.vector_store %arg6[%c0_12, %c0_13, %c0_14], %31 {strides = array<i32>} : memref<1x1x128xf32, #tpu.memory_space<vmem>>, vector<1x1x128xf32>,
    } else {
    }
    %c3_i32 = arith.constant 3 : i32
    %20 = arith.cmpi eq, %1, %c3_i32 : i32
    %21 = arith.extui %20 : i1 to i32
    %c0_i32_7 = arith.constant 0 : i32
    %22 = arith.cmpi ne, %21, %c0_i32_7 : i32
    scf.if %22 {
      %c0 = arith.constant 0 : index
      %c0_8 = arith.constant 0 : index
      %23 = vector.load %arg5[%c0, %c0_8] : memref<10x64xf32, #tpu.memory_space<vmem>>, vector<10x64xf32>
      %c0_9 = arith.constant 0 : index
      %c0_10 = arith.constant 0 : index
      %c0_11 = arith.constant 0 : index
      %24 = vector.load %arg6[%c0_9, %c0_10, %c0_11] : memref<1x1x128xf32, #tpu.memory_space<vmem>>, vector<1x1x128xf32>
      %25 = arith.mulf %23, %23 : vector<10x64xf32>
      %26 = vector.shape_cast %25 : vector<10x64xf32> to vector<1x10x64xf32>
      %cst = arith.constant dense<0.000000e+00> : vector<1xf32>
      %27 = vector.multi_reduction <add>, %26, %cst [1, 2] : vector<1x10x64xf32> to vector<1xf32>
      %28 = vector.shape_cast %27 : vector<1xf32> to vector<1x1x1xf32>
      %29 = vector.extract %28[0, 0, 0] : f32 from vector<1x1x1xf32>
      %30 = vector.broadcast %29 : f32 to vector<1x1x128xf32>
      %31 = arith.addf %24, %30 : vector<1x1x128xf32>
      %c0_12 = arith.constant 0 : index
      %c0_13 = arith.constant 0 : index
      %c0_14 = arith.constant 0 : index
      %32 = vector.load %arg6[%c0_12, %c0_13, %c0_14] : memref<1x1x128xf32, #tpu.memory_space<vmem>>, vector<1x1x128xf32>
      tpu.vector_store %arg6[%c0_12, %c0_13, %c0_14], %31 {strides = array<i32>} : memref<1x1x128xf32, #tpu.memory_space<vmem>>, vector<1x1x128xf32>,
    } else {
    }
    return
  }
  func.func @transform_0(%arg0: i32, %arg1: memref<4xi32, #tpu.memory_space<smem>>) -> (i32, i32) {
    %c0_i32 = arith.constant 0 : i32
    %0 = arith.subi %arg0, %c0_i32 : i32
    %c0_i32_0 = arith.constant 0 : i32
    %1 = arith.maxsi %0, %c0_i32_0 : i32
    %c0_i32_1 = arith.constant 0 : i32
    %2 = arith.minsi %1, %c0_i32_1 : i32
    %c0_i32_2 = arith.constant 0 : i32
    %c0_i32_3 = arith.constant 0 : i32
    return %2, %c0_i32_2 : i32, i32
  }
  func.func @transform_1(%arg0: i32, %arg1: memref<4xi32, #tpu.memory_space<smem>>) -> (i32, i32) {
    %c1_i32 = arith.constant 1 : i32
    %0 = arith.subi %arg0, %c1_i32 : i32
    %c0_i32 = arith.constant 0 : i32
    %1 = arith.maxsi %0, %c0_i32 : i32
    %c0_i32_0 = arith.constant 0 : i32
    %2 = arith.minsi %1, %c0_i32_0 : i32
    %c0_i32_1 = arith.constant 0 : i32
    %c0_i32_2 = arith.constant 0 : i32
    return %2, %c0_i32_1 : i32, i32
  }
  func.func @transform_2(%arg0: i32, %arg1: memref<4xi32, #tpu.memory_space<smem>>) -> (i32, i32) {
    %c2_i32 = arith.constant 2 : i32
    %0 = arith.subi %arg0, %c2_i32 : i32
    %c0_i32 = arith.constant 0 : i32
    %1 = arith.maxsi %0, %c0_i32 : i32
    %c0_i32_0 = arith.constant 0 : i32
    %2 = arith.minsi %1, %c0_i32_0 : i32
    %c0_i32_1 = arith.constant 0 : i32
    %c0_i32_2 = arith.constant 0 : i32
    return %2, %c0_i32_1 : i32, i32
  }
  func.func @transform_3(%arg0: i32, %arg1: memref<4xi32, #tpu.memory_space<smem>>) -> (i32, i32) {
    %c3_i32 = arith.constant 3 : i32
    %0 = arith.subi %arg0, %c3_i32 : i32
    %c0_i32 = arith.constant 0 : i32
    %1 = arith.maxsi %0, %c0_i32 : i32
    %c0_i32_0 = arith.constant 0 : i32
    %2 = arith.minsi %1, %c0_i32_0 : i32
    %c0_i32_1 = arith.constant 0 : i32
    %c0_i32_2 = arith.constant 0 : i32
    return %2, %c0_i32_1 : i32, i32
  }
  func.func @transform_4(%arg0: i32, %arg1: memref<4xi32, #tpu.memory_space<smem>>) -> (i32, i32, i32) {
    %0 = arith.index_cast %arg0 : i32 to index
    %1 = memref.load %arg1[%0] : memref<4xi32, #tpu.memory_space<smem>>
    %c0_i32 = arith.constant 0 : i32
    %c0_i32_0 = arith.constant 0 : i32
    %c0_i32_1 = arith.constant 0 : i32
    return %1, %c0_i32, %c0_i32_0 : i32, i32, i32
  }
}

</mosaic_0001>

<llo_original>
// kernel: tpu_custom_call.1
$region0: #{tpu_custom_call.1}
  #allocation0 [shape = 'u32[]', space=smem, size = 0x4, offset = 0x4, fixed_abs, tag = 'smem constant byte address 0x4 - core index']
  #allocation1 [shape = 'u32[144,128]{1,0:T(1,128)}', space=vmem, size = 0x12000, scoped, tag = 'internal scratch']
  #allocation2 [shape = 's32[1]{0}', space=sflag, size = 0x4, scoped, tag = 'scoped memory for tpu_custom_call.1']
  #allocation3 [shape = 'u8[512]{0}', space=smem, size = 0x200, scoped, tag = 'prefetched SMEM operand 0']
  %s0 = inlined_call_operand.vmem [shape: s32[4], index: 0, kind: input, shape index: {}]
  %s1 = inlined_call_operand.vmem [shape: f32[1,64], index: 1, kind: input, shape index: {}]
  %s2 = inlined_call_operand.vmem [shape: f32[64,32], index: 2, kind: input, shape index: {}]
  %s3 = inlined_call_operand.vmem [shape: f32[1,10], index: 3, kind: input, shape index: {}]
  %s4 = inlined_call_operand.vmem [shape: f32[10,64], index: 4, kind: input, shape index: {}]
  %s5 = inlined_call_operand.hbm [shape: f32[4,1,128], index: 5, kind: output, shape index: {}]
  %s6 = sld [smem:[#allocation0]]
  $region69: #{tpu_custom_call.1} parent=0
    _
  %s8 = ssub.s32 1, %s6
  %s9 = scalar_select 0, %s8, %s6
  %s10 = sshll.u32 %s0, 4
  %s11 = int_to_ptr.vmem [resolvable:$true] %s10
  %13 = dma.vmem_to_smem %s11, 16, [#allocation3], [#allocation2]
  %14 = dma.done [#allocation2], 16
  %15 = sfence
  $region1: #{tpu_custom_call.1} parent=0
    #allocation4 [shape = 'u8[1024]{0}', space=vmem, size = 0x400, scoped, tag = 'output window, operand 0']
    #allocation5 [shape = 's32[2]{0}', space=sflag, size = 0x8, scoped, tag = 'scoped memory for tpu_custom_call.1']
    %16 = vsyncpa [#allocation5], 0
    %s17 = scalar_lea.sflag [#allocation5], 1
    %18 = vsyncpa %s17, 0
    loop: start=0, step=1, limit=6
    $region2: #{tpu_custom_call.1} parent=1 // loop_pre_header
      _
    $region3: #{tpu_custom_call.1} parent=1 // loop_header
      %s20 = sphi 0, %s24
      %p21 = scmp.ge.s32.totalorder %s20, 6
      %s38 = sphi 0, %s40
      %s41 = sphi 0, %s38
      %s42 = sphi 0, %s41
      %s58 = sphi 0, %s42
      %s74 = sphi 0, %s76
      %s77 = sphi 0, %s74
      %s78 = sphi 0, %s77
      %s94 = sphi 0, %s78
      %s110 = sphi 0, %s112
      %s113 = sphi 0, %s110
      %s114 = sphi 0, %s113
      %s130 = sphi 0, %s114
      %s146 = sphi 0, %s148
      %s149 = sphi 0, %s146
      %s150 = sphi 0, %s149
      %s166 = sphi 0, %s150
      %s174 = sphi 0, %s176
      %s177 = sphi 0, %s174
      %s178 = sphi 0, %s177
      %s194 = sphi 0, %s178
    $region4: #{tpu_custom_call.1} parent=1 // loop_header_branch
      %23 = sbr.rel (%p21) target = $region8
    $region5: #{tpu_custom_call.1} parent=1 // loop_body
      %s25 = ssub.s32 %s20, 1
      %s26 = ssub.s32 %s20, 2
      %s27 = sadd.s32 %s20, 1
      %p28 = scmp.gt.s32.totalorder %s20, 0
      %s29 = scalar_select %p28, %s20, 0
      %p30 = scmp.lt.s32.totalorder %s29, 0
      %s31 = scalar_select %p30, %s29, 0
      %p32 = scmp.gt.s32.totalorder %s27, 0
      %s33 = scalar_select %p32, %s27, 0
      %p34 = scmp.lt.s32.totalorder %s33, 0
      %s35 = scalar_select %p34, %s33, 0
      %s36 = ssub.s32 %s31, %s35
      %p37 = scmp.eq.s32.totalorder %s36, 0
      %s39 = sadd.s32 %s38, 1
      %s40 = scalar_select %p37, %s38, %s39
      %p43 = pneg %p37
      %p44 = scmp.eq.s32.totalorder %s20, 3
      %p45 = por %p43, %p44
      %p46 = scmp.ne.s32.totalorder %s38, %s41
      %p47 = scmp.eq.s32.totalorder %s20, 0
      %p48 = por %p46, %p47
      %p49 = scmp.ne.s32.totalorder %s38, %s41
      %p50 = scmp.eq.s32.totalorder %s25, 3
      %p51 = por %p49, %p50
      %p52 = scmp.ne.s32.totalorder %s41, %s42
      %p53 = scmp.eq.s32.totalorder %s25, 0
      %p54 = por %p52, %p53
      %p55 = scmp.ne.s32.totalorder %s41, %s42
      %p56 = scmp.eq.s32.totalorder %s26, 3
      %p57 = por %p55, %p56
      %p59 = scmp.ne.s32.totalorder %s42, %s58
      %p60 = scmp.eq.s32.totalorder %s26, 0
      %p61 = por %p59, %p60
      %s62 = ssub.s32 %s20, 1
      %p63 = scmp.gt.s32.totalorder %s62, 0
      %s64 = scalar_select %p63, %s62, 0
      %p65 = scmp.lt.s32.totalorder %s64, 0
      %s66 = scalar_select %p65, %s64, 0
      %s67 = ssub.s32 %s27, 1
      %p68 = scmp.gt.s32.totalorder %s67, 0
      %s69 = scalar_select %p68, %s67, 0
      %p70 = scmp.lt.s32.totalorder %s69, 0
      %s71 = scalar_select %p70, %s69, 0
      %s72 = ssub.s32 %s66, %s71
      %p73 = scmp.eq.s32.totalorder %s72, 0
      %s75 = sadd.s32 %s74, 1
      %s76 = scalar_select %p73, %s74, %s75
      %p79 = pneg %p73
      %p80 = scmp.eq.s32.totalorder %s20, 3
      %p81 = por %p79, %p80
      %p82 = scmp.ne.s32.totalorder %s74, %s77
      %p83 = scmp.eq.s32.totalorder %s20, 0
      %p84 = por %p82, %p83
      %p85 = scmp.ne.s32.totalorder %s74, %s77
      %p86 = scmp.eq.s32.totalorder %s25, 3
      %p87 = por %p85, %p86
      %p88 = scmp.ne.s32.totalorder %s77, %s78
      %p89 = scmp.eq.s32.totalorder %s25, 0
      %p90 = por %p88, %p89
      %p91 = scmp.ne.s32.totalorder %s77, %s78
      %p92 = scmp.eq.s32.totalorder %s26, 3
      %p93 = por %p91, %p92
      %p95 = scmp.ne.s32.totalorder %s78, %s94
      %p96 = scmp.eq.s32.totalorder %s26, 0
      %p97 = por %p95, %p96
      %s98 = ssub.s32 %s20, 2
      %p99 = scmp.gt.s32.totalorder %s98, 0
      %s100 = scalar_select %p99, %s98, 0
      %p101 = scmp.lt.s32.totalorder %s100, 0
      %s102 = scalar_select %p101, %s100, 0
      %s103 = ssub.s32 %s27, 2
      %p104 = scmp.gt.s32.totalorder %s103, 0
      %s105 = scalar_select %p104, %s103, 0
      %p106 = scmp.lt.s32.totalorder %s105, 0
      %s107 = scalar_select %p106, %s105, 0
      %s108 = ssub.s32 %s102, %s107
      %p109 = scmp.eq.s32.totalorder %s108, 0
      %s111 = sadd.s32 %s110, 1
      %s112 = scalar_select %p109, %s110, %s111
      %p115 = pneg %p109
      %p116 = scmp.eq.s32.totalorder %s20, 3
      %p117 = por %p115, %p116
      %p118 = scmp.ne.s32.totalorder %s110, %s113
      %p119 = scmp.eq.s32.totalorder %s20, 0
      %p120 = por %p118, %p119
      %p121 = scmp.ne.s32.totalorder %s110, %s113
      %p122 = scmp.eq.s32.totalorder %s25, 3
      %p123 = por %p121, %p122
      %p124 = scmp.ne.s32.totalorder %s113, %s114
      %p125 = scmp.eq.s32.totalorder %s25, 0
      %p126 = por %p124, %p125
      %p127 = scmp.ne.s32.totalorder %s113, %s114
      %p128 = scmp.eq.s32.totalorder %s26, 3
      %p129 = por %p127, %p128
      %p131 = scmp.ne.s32.totalorder %s114, %s130
      %p132 = scmp.eq.s32.totalorder %s26, 0
      %p133 = por %p131, %p132
      %s134 = ssub.s32 %s20, 3
      %p135 = scmp.gt.s32.totalorder %s134, 0
      %s136 = scalar_select %p135, %s134, 0
      %p137 = scmp.lt.s32.totalorder %s136, 0
      %s138 = scalar_select %p137, %s136, 0
      %s139 = ssub.s32 %s27, 3
      %p140 = scmp.gt.s32.totalorder %s139, 0
      %s141 = scalar_select %p140, %s139, 0
      %p142 = scmp.lt.s32.totalorder %s141, 0
      %s143 = scalar_select %p142, %s141, 0
      %s144 = ssub.s32 %s138, %s143
      %p145 = scmp.eq.s32.totalorder %s144, 0
      %s147 = sadd.s32 %s146, 1
      %s148 = scalar_select %p145, %s146, %s147
      %p151 = pneg %p145
      %p152 = scmp.eq.s32.totalorder %s20, 3
      %p153 = por %p151, %p152
      %p154 = scmp.ne.s32.totalorder %s146, %s149
      %p155 = scmp.eq.s32.totalorder %s20, 0
      %p156 = por %p154, %p155
      %p157 = scmp.ne.s32.totalorder %s146, %s149
      %p158 = scmp.eq.s32.totalorder %s25, 3
      %p159 = por %p157, %p158
      %p160 = scmp.ne.s32.totalorder %s149, %s150
      %p161 = scmp.eq.s32.totalorder %s25, 0
      %p162 = por %p160, %p161
      %p163 = scmp.ne.s32.totalorder %s149, %s150
      %p164 = scmp.eq.s32.totalorder %s26, 3
      %p165 = por %p163, %p164
      %p167 = scmp.ne.s32.totalorder %s150, %s166
      %p168 = scmp.eq.s32.totalorder %s26, 0
      %p169 = por %p167, %p168
      %s170 = sld [smem:[#allocation3 + %s20]]
      %s171 = sld [smem:[#allocation3 + %s27]]
      %s172 = ssub.s32 %s170, %s171
      %p173 = scmp.eq.s32.totalorder %s172, 0
      %s175 = sadd.s32 %s174, 1
      %s176 = scalar_select %p173, %s174, %s175
      %p179 = pneg %p173
      %p180 = scmp.eq.s32.totalorder %s20, 3
      %p181 = por %p179, %p180
      %p182 = scmp.ne.s32.totalorder %s174, %s177
      %p183 = scmp.eq.s32.totalorder %s20, 0
      %p184 = por %p182, %p183
      %p185 = scmp.ne.s32.totalorder %s174, %s177
      %p186 = scmp.eq.s32.totalorder %s25, 3
      %p187 = por %p185, %p186
      %p188 = scmp.ne.s32.totalorder %s177, %s178
      %p189 = scmp.eq.s32.totalorder %s25, 0
      %p190 = por %p188, %p189
      %p191 = scmp.ne.s32.totalorder %s177, %s178
      %p192 = scmp.eq.s32.totalorder %s26, 3
      %p193 = por %p191, %p192
      %p195 = scmp.ne.s32.totalorder %s178, %s194
      %p196 = scmp.eq.s32.totalorder %s26, 0
      %p197 = por %p195, %p196
      %p198 = scmp.le.s32.totalorder 1, %s20
      %p199 = scmp.lt.s32.totalorder %s20, 5
      %p200 = pnand %p198, %p199
      %p201 = pneg %p200
      // Predicated region
      $region9: #{tpu_custom_call.1} parent=5 // pred_check
        _
      $region10: #{tpu_custom_call.1} parent=5 // pred_check_branch
        %203 = sbr.rel (%p200) target = $region12
      $region11: #{tpu_custom_call.1} parent=5 // pred_region
        %s204 = ssub.s32 %s20, 1
      $region12: #{tpu_custom_call.1} parent=5 // pred_fallthru
        _
      %p205 = scmp.lt.s32.totalorder %s20, 4
      // Predicated region
      $region13: #{tpu_custom_call.1} parent=5 // pred_check
        %p206 = pneg %p205
      $region14: #{tpu_custom_call.1} parent=5 // pred_check_branch
        %208 = sbr.rel (%p206) target = $region16
      $region15: #{tpu_custom_call.1} parent=5 // pred_region
        // Predicated region
        $region17: #{tpu_custom_call.1} parent=15 // pred_check
          %p209 = pneg %p48
        $region18: #{tpu_custom_call.1} parent=15 // pred_check_branch
          %211 = sbr.rel (%p209) target = $region20
        $region19: #{tpu_custom_call.1} parent=15 // pred_region
          %p212 = scmp.gt.s32.totalorder %s20, 0
          %s213 = scalar_select %p212, %s20, 0
          %p214 = scmp.lt.s32.totalorder %s213, 0
          %s215 = scalar_select %p214, %s213, 0
          %p216 = scmp.lt.s32.totalorder %s215, 0
          %s217 = scalar_select %p216, %s215, 0
          %s218 = scalar_lea.vmem %s1, %s217
          %p219 = scmp.gt.s32.totalorder %s20, 0
          %s220 = scalar_select %p219, %s20, 0
          %p221 = scmp.lt.s32.totalorder %s220, 0
          %s222 = scalar_select %p221, %s220, 0
        $region20: #{tpu_custom_call.1} parent=15 // pred_fallthru
          _
        // Predicated region
        $region21: #{tpu_custom_call.1} parent=15 // pred_check
          %p223 = pneg %p84
        $region22: #{tpu_custom_call.1} parent=15 // pred_check_branch
          %225 = sbr.rel (%p223) target = $region24
        $region23: #{tpu_custom_call.1} parent=15 // pred_region
          %s226 = ssub.s32 %s20, 1
          %p227 = scmp.gt.s32.totalorder %s226, 0
          %s228 = scalar_select %p227, %s226, 0
          %p229 = scmp.lt.s32.totalorder %s228, 0
          %s230 = scalar_select %p229, %s228, 0
          %s231 = smul.u32 8, %s230
          %p232 = scmp.lt.s32.totalorder %s231, 7
          %s233 = scalar_select %p232, %s231, 7
          %s234 = smul.addr %s233, 8
          %s235 = scalar_lea.vmem %s2, %s234
          %s236 = ssub.s32 %s20, 1
          %p237 = scmp.gt.s32.totalorder %s236, 0
          %s238 = scalar_select %p237, %s236, 0
          %p239 = scmp.lt.s32.totalorder %s238, 0
          %s240 = scalar_select %p239, %s238, 0
          %s241 = smul.u32 8, %s240
        $region24: #{tpu_custom_call.1} parent=15 // pred_fallthru
          _
        // Predicated region
        $region25: #{tpu_custom_call.1} parent=15 // pred_check
          %p242 = pneg %p120
        $region26: #{tpu_custom_call.1} parent=15 // pred_check_branch
          %244 = sbr.rel (%p242) target = $region28
        $region27: #{tpu_custom_call.1} parent=15 // pred_region
          %s245 = ssub.s32 %s20, 2
          %p246 = scmp.gt.s32.totalorder %s245, 0
          %s247 = scalar_select %p246, %s245, 0
          %p248 = scmp.lt.s32.totalorder %s247, 0
          %s249 = scalar_select %p248, %s247, 0
          %p250 = scmp.lt.s32.totalorder %s249, 0
          %s251 = scalar_select %p250, %s249, 0
          %s252 = scalar_lea.vmem %s3, %s251
          %s253 = ssub.s32 %s20, 2
          %p254 = scmp.gt.s32.totalorder %s253, 0
          %s255 = scalar_select %p254, %s253, 0
          %p256 = scmp.lt.s32.totalorder %s255, 0
          %s257 = scalar_select %p256, %s255, 0
        $region28: #{tpu_custom_call.1} parent=15 // pred_fallthru
          _
        // Predicated region
        $region29: #{tpu_custom_call.1} parent=15 // pred_check
          %p258 = pneg %p156
        $region30: #{tpu_custom_call.1} parent=15 // pred_check_branch
          %260 = sbr.rel (%p258) target = $region32
        $region31: #{tpu_custom_call.1} parent=15 // pred_region
          %s261 = ssub.s32 %s20, 3
          %p262 = scmp.gt.s32.totalorder %s261, 0
          %s263 = scalar_select %p262, %s261, 0
          %p264 = scmp.lt.s32.totalorder %s263, 0
          %s265 = scalar_select %p264, %s263, 0
          %s266 = smul.u32 2, %s265
          %p267 = scmp.lt.s32.totalorder %s266, 1
          %s268 = scalar_select %p267, %s266, 1
          %s269 = smul.addr %s268, 8
          %s270 = scalar_lea.vmem %s4, %s269
          %s271 = ssub.s32 %s20, 3
          %p272 = scmp.gt.s32.totalorder %s271, 0
          %s273 = scalar_select %p272, %s271, 0
          %p274 = scmp.lt.s32.totalorder %s273, 0
          %s275 = scalar_select %p274, %s273, 0
          %s276 = smul.u32 2, %s275
        $region32: #{tpu_custom_call.1} parent=15 // pred_fallthru
          _
      $region16: #{tpu_custom_call.1} parent=5 // pred_fallthru
        _
      %p277 = scmp.le.s32.totalorder 1, %s20
      %p278 = scmp.lt.s32.totalorder %s20, 5
      %p279 = pnand %p277, %p278
      %p280 = pneg %p279
      // Predicated region
      $region33: #{tpu_custom_call.1} parent=5 // pred_check
        _
      $region34: #{tpu_custom_call.1} parent=5 // pred_check_branch
        %282 = sbr.rel (%p279) target = $region36
      $region35: #{tpu_custom_call.1} parent=5 // pred_region
        %s283 = ssub.s32 %s20, 1
        %p284 = scmp.gt.s32.totalorder %s25, 0
        %s285 = scalar_select %p284, %s25, 0
        %p286 = scmp.lt.s32.totalorder %s285, 0
        %s287 = scalar_select %p286, %s285, 0
        %p288 = scmp.lt.s32.totalorder %s287, 0
        %s289 = scalar_select %p288, %s287, 0
        %s290 = scalar_lea.vmem %s1, %s289
        %p291 = pneg %p54
        %p292 = pneg %p51
        %s293 = ssub.s32 %s25, 1
        %p294 = scmp.gt.s32.totalorder %s293, 0
        %s295 = scalar_select %p294, %s293, 0
        %p296 = scmp.lt.s32.totalorder %s295, 0
        %s297 = scalar_select %p296, %s295, 0
        %s298 = smul.u32 8, %s297
        %p299 = scmp.lt.s32.totalorder %s298, 7
        %s300 = scalar_select %p299, %s298, 7
        %s301 = smul.addr %s300, 8
        %s302 = scalar_lea.vmem %s2, %s301
        %p303 = pneg %p90
        %p304 = pneg %p87
        %s305 = ssub.s32 %s25, 2
        %p306 = scmp.gt.s32.totalorder %s305, 0
        %s307 = scalar_select %p306, %s305, 0
        %p308 = scmp.lt.s32.totalorder %s307, 0
        %s309 = scalar_select %p308, %s307, 0
        %p310 = scmp.lt.s32.totalorder %s309, 0
        %s311 = scalar_select %p310, %s309, 0
        %s312 = scalar_lea.vmem %s3, %s311
        %p313 = pneg %p126
        %p314 = pneg %p123
        %s315 = ssub.s32 %s25, 3
        %p316 = scmp.gt.s32.totalorder %s315, 0
        %s317 = scalar_select %p316, %s315, 0
        %p318 = scmp.lt.s32.totalorder %s317, 0
        %s319 = scalar_select %p318, %s317, 0
        %s320 = smul.u32 2, %s319
        %p321 = scmp.lt.s32.totalorder %s320, 1
        %s322 = scalar_select %p321, %s320, 1
        %s323 = smul.addr %s322, 8
        %s324 = scalar_lea.vmem %s4, %s323
        %p325 = pneg %p162
        %p326 = pneg %p159
        %p327 = pneg %p190
        %p328 = pneg %p187
        %s329 = sand.u32 %s177, 1
        %s330 = scalar_lea.sflag [#allocation5], %s329
        %s331 = sand.u32 %s177, 1
        %s332 = scalar_lea.vmem [#allocation4], %s331
        %p333 = scmp.gt.s32.totalorder %s25, 0
        %s334 = scalar_select %p333, %s25, 0
        %p335 = scmp.lt.s32.totalorder %s334, 0
        %s336 = scalar_select %p335, %s334, 0
        %p337 = scmp.lt.s32.totalorder %s336, 0
        %s338 = scalar_select %p337, %s336, 0
        %s339 = scalar_lea.vmem %s1, %s338
        %p340 = scmp.gt.s32.totalorder %s25, 0
        %s341 = scalar_select %p340, %s25, 0
        %p342 = scmp.lt.s32.totalorder %s341, 0
        %s343 = scalar_select %p342, %s341, 0
        %s344 = ssub.s32 %s25, 1
        %p345 = scmp.gt.s32.totalorder %s344, 0
        %s346 = scalar_select %p345, %s344, 0
        %p347 = scmp.lt.s32.totalorder %s346, 0
        %s348 = scalar_select %p347, %s346, 0
        %s349 = smul.u32 8, %s348
        %p350 = scmp.lt.s32.totalorder %s349, 7
        %s351 = scalar_select %p350, %s349, 7
        %s352 = smul.addr %s351, 8
        %s353 = scalar_lea.vmem %s2, %s352
        %s354 = ssub.s32 %s25, 1
        %p355 = scmp.gt.s32.totalorder %s354, 0
        %s356 = scalar_select %p355, %s354, 0
        %p357 = scmp.lt.s32.totalorder %s356, 0
        %s358 = scalar_select %p357, %s356, 0
        %s359 = smul.u32 8, %s358
        %s360 = ssub.s32 %s25, 2
        %p361 = scmp.gt.s32.totalorder %s360, 0
        %s362 = scalar_select %p361, %s360, 0
        %p363 = scmp.lt.s32.totalorder %s362, 0
        %s364 = scalar_select %p363, %s362, 0
        %p365 = scmp.lt.s32.totalorder %s364, 0
        %s366 = scalar_select %p365, %s364, 0
        %s367 = scalar_lea.vmem %s3, %s366
        %s368 = ssub.s32 %s25, 2
        %p369 = scmp.gt.s32.totalorder %s368, 0
        %s370 = scalar_select %p369, %s368, 0
        %p371 = scmp.lt.s32.totalorder %s370, 0
        %s372 = scalar_select %p371, %s370, 0
        %s373 = ssub.s32 %s25, 3
        %p374 = scmp.gt.s32.totalorder %s373, 0
        %s375 = scalar_select %p374, %s373, 0
        %p376 = scmp.lt.s32.totalorder %s375, 0
        %s377 = scalar_select %p376, %s375, 0
        %s378 = smul.u32 2, %s377
        %p379 = scmp.lt.s32.totalorder %s378, 1
        %s380 = scalar_select %p379, %s378, 1
        %s381 = smul.addr %s380, 8
        %s382 = scalar_lea.vmem %s4, %s381
        %s383 = ssub.s32 %s25, 3
        %p384 = scmp.gt.s32.totalorder %s383, 0
        %s385 = scalar_select %p384, %s383, 0
        %p386 = scmp.lt.s32.totalorder %s385, 0
        %s387 = scalar_select %p386, %s385, 0
        %s388 = smul.u32 2, %s387
        %s389 = sld [smem:[#allocation3 + %s25]]
        %s390 = sld [smem:[#allocation3 + %s25]]
        %s391 = ssub.s32 %s25, 1
        %p392 = scmp.gt.s32.totalorder %s391, 0
        %s393 = scalar_select %p392, %s391, 0
        %s394 = sld [smem:[#allocation3 + %s393]]
        %p395 = scmp.eq.s32.totalorder %s25, 0
        %p396 = scmp.ne.s32.totalorder %s390, %s394
        %p397 = por %p395, %p396
        // Predicated region
        $region37: #{tpu_custom_call.1} parent=35 // pred_check
          %p398 = pneg %p397
        $region38: #{tpu_custom_call.1} parent=35 // pred_check_branch
          %400 = sbr.rel (%p398) target = $region40
        $region39: #{tpu_custom_call.1} parent=35 // pred_region
          %401 = vst [vmem:[%s332] sm:$0x1] 0.0
        $region40: #{tpu_custom_call.1} parent=35 // pred_fallthru
          _
        %p402 = scmp.eq.s32.totalorder %s390, 0
        // Predicated region
        $region41: #{tpu_custom_call.1} parent=35 // pred_check
          %p403 = pneg %p402
        $region42: #{tpu_custom_call.1} parent=35 // pred_check_branch
          %405 = sbr.rel (%p403) target = $region44
        $region43: #{tpu_custom_call.1} parent=35 // pred_region
          %v406 = vld [vmem:[%s339] sm:$0x1]
          %v407 = vld [vmem:[%s332] sm:$0x1]
          %v408 = vmul.f32 %v406, %v406
          %vm409 = vcmask 516096
          %v410 = vsel %vm409, %v408, 0.0
          %411 = vadd.xlane.f32.xlu0 %v410
          %v412 = vpop.xlane.xlu0 %411
          %v413 = vrot.slane %v412, 4
          %v414 = vadd.f32 %v412, %v413
          %v415 = vrot.slane %v414, 2
          %v416 = vadd.f32 %v414, %v415
          %v417 = vrot.slane %v416, 1
          %v418 = vadd.f32 %v416, %v417
          %s419 = vtos %v418
          %v420 = vstv %s419
          %v421 = vadd.f32 %v407, %v420
          %422 = vst [vmem:[%s332] sm:$0x1] %v421
        $region44: #{tpu_custom_call.1} parent=35 // pred_fallthru
          _
        %p423 = scmp.eq.s32.totalorder %s390, 1
        // Predicated region
        $region45: #{tpu_custom_call.1} parent=35 // pred_check
          %p424 = pneg %p423
        $region46: #{tpu_custom_call.1} parent=35 // pred_check_branch
          %426 = sbr.rel (%p424) target = $region48
        $region47: #{tpu_custom_call.1} parent=35 // pred_region
          %v427 = vld [vmem:[%s353] sm:$0xff]
          %v428 = vld [vmem:[%s353 + $0x8] sm:$0xff]
          %v429 = vld [vmem:[%s353 + $0x10] sm:$0xff]
          %v430 = vld [vmem:[%s353 + $0x18] sm:$0xff]
          %v431 = vld [vmem:[%s353 + $0x20] sm:$0xff]
          %v432 = vld [vmem:[%s353 + $0x28] sm:$0xff]
          %v433 = vld [vmem:[%s353 + $0x30] sm:$0xff]
          %v434 = vld [vmem:[%s353 + $0x38] sm:$0xff]
          %v435 = vld [vmem:[%s332] sm:$0x1]
          %v436 = vmul.f32 %v427, %v427
          %v437 = vmul.f32 %v428, %v428
          %v438 = vmul.f32 %v429, %v429
          %v439 = vmul.f32 %v430, %v430
          %v440 = vmul.f32 %v431, %v431
          %v441 = vmul.f32 %v432, %v432
          %v442 = vmul.f32 %v433, %v433
          %v443 = vmul.f32 %v434, %v434
          %vm444 = vcmask 261120
          %v445 = vsel %vm444, %v436, 0.0
          %v446 = vsel %vm444, %v437, 0.0
          %v447 = vadd.f32 %v445, %v446
          %v448 = vsel %vm444, %v438, 0.0
          %v449 = vadd.f32 %v447, %v448
          %v450 = vsel %vm444, %v439, 0.0
          %v451 = vadd.f32 %v449, %v450
          %v452 = vsel %vm444, %v440, 0.0
          %v453 = vadd.f32 %v451, %v452
          %v454 = vsel %vm444, %v441, 0.0
          %v455 = vadd.f32 %v453, %v454
          %v456 = vsel %vm444, %v442, 0.0
          %v457 = vadd.f32 %v455, %v456
          %v458 = vsel %vm444, %v443, 0.0
          %v459 = vadd.f32 %v457, %v458
          %460 = vadd.xlane.f32.xlu0 %v459
          %v461 = vpop.xlane.xlu0 %460
          %v462 = vrot.slane %v461, 4
          %v463 = vadd.f32 %v461, %v462
          %v464 = vrot.slane %v463, 2
          %v465 = vadd.f32 %v463, %v464
          %v466 = vrot.slane %v465, 1
          %v467 = vadd.f32 %v465, %v466
          %s468 = vtos %v467
          %v469 = vstv %s468
          %v470 = vadd.f32 %v435, %v469
          %471 = vst [vmem:[%s332] sm:$0x1] %v470
        $region48: #{tpu_custom_call.1} parent=35 // pred_fallthru
          _
        %p472 = scmp.eq.s32.totalorder %s390, 2
        // Predicated region
        $region49: #{tpu_custom_call.1} parent=35 // pred_check
          %p473 = pneg %p472
        $region50: #{tpu_custom_call.1} parent=35 // pred_check_branch
          %475 = sbr.rel (%p473) target = $region52
        $region51: #{tpu_custom_call.1} parent=35 // pred_region
          %v476 = vld [vmem:[%s367] sm:$0x1]
          %v477 = vld [vmem:[%s332] sm:$0x1]
          %v478 = vmul.f32 %v476, %v476
          %vm479 = vcmask 73728
          %v480 = vsel %vm479, %v478, 0.0
          %481 = vadd.xlane.f32.xlu0 %v480
          %v482 = vpop.xlane.xlu0 %481
          %v483 = vrot.slane %v482, 4
          %v484 = vadd.f32 %v482, %v483
          %v485 = vrot.slane %v484, 2
          %v486 = vadd.f32 %v484, %v485
          %v487 = vrot.slane %v486, 1
          %v488 = vadd.f32 %v486, %v487
          %s489 = vtos %v488
          %v490 = vstv %s489
          %v491 = vadd.f32 %v477, %v490
          %492 = vst [vmem:[%s332] sm:$0x1] %v491
        $region52: #{tpu_custom_call.1} parent=35 // pred_fallthru
          _
        %p493 = scmp.eq.s32.totalorder %s390, 3
        // Predicated region
        $region53: #{tpu_custom_call.1} parent=35 // pred_check
          %p494 = pneg %p493
        $region54: #{tpu_custom_call.1} parent=35 // pred_check_branch
          %496 = sbr.rel (%p494) target = $region56
        $region55: #{tpu_custom_call.1} parent=35 // pred_region
          %v497 = vld [vmem:[%s382] sm:$0xff]
          %v498 = vld [vmem:[%s382 + $0x8] sm:$0x3]
          %v499 = vld [vmem:[%s332] sm:$0x1]
          %v500 = vmul.f32 %v497, %v497
          %v501 = vmul.f32 %v498, %v498
          %vm502 = vcmask 523264
          %v503 = vsel %vm502, %v500, 0.0
          %vm504 = vcmask 517120
          %v505 = vsel %vm504, %v501, 0.0
          %v506 = vadd.f32 %v503, %v505
          %507 = vadd.xlane.f32.xlu0 %v506
          %v508 = vpop.xlane.xlu0 %507
          %v509 = vrot.slane %v508, 4
          %v510 = vadd.f32 %v508, %v509
          %v511 = vrot.slane %v510, 2
          %v512 = vadd.f32 %v510, %v511
          %v513 = vrot.slane %v512, 1
          %v514 = vadd.f32 %v512, %v513
          %s515 = vtos %v514
          %v516 = vstv %s515
          %v517 = vadd.f32 %v499, %v516
          %518 = vst [vmem:[%s332] sm:$0x1] %v517
        $region56: #{tpu_custom_call.1} parent=35 // pred_fallthru
          _
        %s519 = sand.u32 %s177, 1
        %s520 = scalar_lea.sflag [#allocation5], %s519
        %s521 = sand.u32 %s177, 1
        %s522 = scalar_lea.vmem [#allocation4], %s521
        // Predicated region
        $region57: #{tpu_custom_call.1} parent=35 // pred_check
          %p523 = pneg %p187
        $region58: #{tpu_custom_call.1} parent=35 // pred_check_branch
          %525 = sbr.rel (%p523) target = $region60
        $region59: #{tpu_custom_call.1} parent=35 // pred_region
          %s526 = sld [smem:[#allocation3 + %s25]]
          %s528 = ssub.s32 16, 16
          %529 = vsyncadd %s520, %s528
          %s530 = smul.addr %s526, 16
          %s531 = scalar_lea.hbm %s5, %s530
          %s533 = sshll.u32 %s522, 4
          %s534 = int_to_ptr.vmem [resolvable:$true] %s533
          %536 = dma.vmem_to_hbm [thread:$0]  %s534, 16, %s531, %s520
        $region60: #{tpu_custom_call.1} parent=35 // pred_fallthru
          _
      $region36: #{tpu_custom_call.1} parent=5 // pred_fallthru
        _
      %p537 = scmp.le.s32.totalorder 2, %s20
      // Predicated region
      $region61: #{tpu_custom_call.1} parent=5 // pred_check
        %p538 = pneg %p537
      $region62: #{tpu_custom_call.1} parent=5 // pred_check_branch
        %540 = sbr.rel (%p538) target = $region64
      $region63: #{tpu_custom_call.1} parent=5 // pred_region
        %s541 = ssub.s32 %s20, 2
        // Predicated region
        $region65: #{tpu_custom_call.1} parent=63 // pred_check
          %p542 = pneg %p193
        $region66: #{tpu_custom_call.1} parent=63 // pred_check_branch
          %544 = sbr.rel (%p542) target = $region68
        $region67: #{tpu_custom_call.1} parent=63 // pred_region
          %s545 = sand.u32 %s178, 1
          %s546 = scalar_lea.sflag [#allocation5], %s545
          %s547 = sand.u32 %s178, 1
          %s548 = scalar_lea.vmem [#allocation4], %s547
          %549 = dma.done %s546, 16
        $region68: #{tpu_custom_call.1} parent=63 // pred_fallthru
          _
      $region64: #{tpu_custom_call.1} parent=5 // pred_fallthru
        _
    $region6: #{tpu_custom_call.1} parent=1 // loop_footer
      %s24 = sadd.s32 1, %s20
    $region7: #{tpu_custom_call.1} parent=1 // loop_footer_branch
      %19 = sbr.rel target = $region3
    $region8: #{tpu_custom_call.1} parent=1 // loop_exit
      _
    %550 = vsyncpa [#allocation5], 1
    %s551 = scalar_lea.sflag [#allocation5], 1
    %552 = vsyncpa %s551, 1

</llo_original>
